<compile_context>
chip_gen: v7x
topology: tpu7x:2x2x1
jax: 0.10.0
libtpu: 0.0.40
codegen_flags: <defaults>
</compile_context>

<pallas_src>
import functools

import jax
import jax.numpy as jnp
from jax.experimental import pallas as pl
from jax.experimental.pallas import tpu as pltpu

HIDDEN = 120          # hidden / output width
IN_DIM = 3            # (x, y, t)
FEAT_PAD = 128        # 120 padded to 128 lanes for MXU layers
N_LAYERS = 8          # 7 hidden (tanh) + 1 output (linear)
N_MATMUL = N_LAYERS - 1   # layers 2..8 run on the MXU


def _trunk_kernel(in_ref, w0_ref, wh_ref, b_ref, o_ref):
    """in_ref: (tm, 3)   w0_ref: (3, 128)   wh_ref: (7, 128, 128)
       b_ref: (8, 128)   o_ref: (tm, 120)"""
    # Layer 1 (3 -> 120) on the VPU: three broadcast FMAs instead of a matmul
    # whose contraction dim would be 97% zero padding.
    xv = in_ref[:, 0:1]
    yv = in_ref[:, 1:2]
    tv = in_ref[:, 2:3]
    z0 = (xv * w0_ref[0][None, :]
          + yv * w0_ref[1][None, :]
          + tv * w0_ref[2][None, :]
          + b_ref[0][None, :])
    h = jnp.tanh(z0)

    # Hidden layers 2..7 (tanh) on the MXU, f32 accumulation.
    for l in range(N_MATMUL - 1):
        z = jnp.dot(h, wh_ref[l], preferred_element_type=jnp.float32)
        h = jnp.tanh(z + b_ref[l + 1][None, :])

    # Output layer (no activation). Trim the 8 zero pad lanes in-kernel so the
    # kernel emits a lane-120 output directly (no post-kernel HBM copy).
    z = jnp.dot(h, wh_ref[N_MATMUL - 1], preferred_element_type=jnp.float32)
    o_ref[...] = (z + b_ref[N_LAYERS - 1][None, :])[:, :HIDDEN]


@functools.partial(jax.jit, static_argnames=("tm",))
def _net_trunk_call(inp, w0_pad, wh_pad, b_pad, *, tm):
    n = inp.shape[0]
    grid = pl.cdiv(n, tm)
    n_pad = grid * tm
    if n_pad != n:
        # Cheap: the input is only (n, 3). The OUTPUT stays (n, 120); Pallas
        # clips the out-of-bounds rows of the boundary block on writeback.
        inp = jnp.pad(inp, ((0, n_pad - n), (0, 0)))

    out = pl.pallas_call(
        _trunk_kernel,
        out_shape=jax.ShapeDtypeStruct((n, HIDDEN), jnp.float32),
        grid_spec=pltpu.PrefetchScalarGridSpec(
            num_scalar_prefetch=0,
            grid=(grid,),
            in_specs=[
                pl.BlockSpec((tm, IN_DIM), lambda i: (i, 0)),                 # [x|y|t]
                pl.BlockSpec((IN_DIM, FEAT_PAD), lambda i: (0, 0)),           # W1
                pl.BlockSpec((N_MATMUL, FEAT_PAD, FEAT_PAD),
                             lambda i: (0, 0, 0)),                            # W2..W8
                pl.BlockSpec((N_LAYERS, FEAT_PAD), lambda i: (0, 0)),         # biases
            ],
            out_specs=pl.BlockSpec((tm, HIDDEN), lambda i: (i, 0)),
        ),
        compiler_params=pltpu.CompilerParams(
            dimension_semantics=("parallel",),
            vmem_limit_bytes=32 * 1024 * 1024,
        ),
    )(inp, w0_pad, wh_pad, b_pad)
    return out


def net_trunk_pallas(x, y, t, w0_pad, wh_pad, b_pad, *, tm=2048):
    """x, y, t: (N, 1) float32.  Returns (N, 120) float32."""
    n = x.shape[0]
    inp = jnp.concatenate([x, y, t], axis=1).astype(jnp.float32)
    # Power-of-two bucketed tile: small batches don't pay for a 2048-row tile,
    # and the number of distinct Mosaic compiles stays bounded.
    tm_eff = int(min(tm, max(8, pl.next_power_of_2(n))))
    return _net_trunk_call(inp, w0_pad, wh_pad, b_pad, tm=tm_eff)


def init_params(key):
    """Deterministic synthetic parameters matching the nn.Linear shapes.

    PyTorch nn.Linear(in, out) stores weight (out, in); we keep the transposed
    (in, out) form so the kernel computes h @ W + b.  W1 stays (3, 128); the
    seven 120x120 layers are zero-padded to (128, 128).  Padding is exact:
    padded rows/cols and biases are zero and tanh(0) = 0.
    """
    in_dims = [IN_DIM] + [HIDDEN] * (N_LAYERS - 1)
    out_dims = [HIDDEN] * N_LAYERS
    w0_pad = jnp.zeros((IN_DIM, FEAT_PAD), jnp.float32)
    wh_pad = jnp.zeros((N_MATMUL, FEAT_PAD, FEAT_PAD), jnp.float32)
    b_pad = jnp.zeros((N_LAYERS, FEAT_PAD), jnp.float32)
    raw = []
    for l in range(N_LAYERS):
        key, kw, kb = jax.random.split(key, 3)
        w = 0.1 * jax.random.normal(kw, (in_dims[l], out_dims[l]), jnp.float32)
        b = 0.1 * jax.random.normal(kb, (out_dims[l],), jnp.float32)
        raw.append((w, b))
        if l == 0:
            w0_pad = w0_pad.at[:, :out_dims[l]].set(w)
        else:
            wh_pad = wh_pad.at[l - 1, :in_dims[l], :out_dims[l]].set(w)
        b_pad = b_pad.at[l, :out_dims[l]].set(b)
    return w0_pad, wh_pad, b_pad, raw


def reference(x, y, t, raw):
    h = jnp.concatenate([x, y, t], axis=1).astype(jnp.float32)
    for l in range(N_LAYERS - 1):
        w, b = raw[l]
        h = jnp.tanh(h @ w + b)
    w, b = raw[N_LAYERS - 1]
    return h @ w + b


if __name__ == "__main__":
    key = jax.random.PRNGKey(0)
    kx, ky, kt, kp = jax.random.split(key, 4)

    # Small deterministic test.
    N = 16
    x = jax.random.normal(kx, (N, 1), jnp.float32)
    y = jax.random.normal(ky, (N, 1), jnp.float32)
    t = jax.random.uniform(kt, (N, 1), jnp.float32)
    w0_pad, wh_pad, b_pad, raw = init_params(kp)

    out = jax.block_until_ready(net_trunk_pallas(x, y, t, w0_pad, wh_pad, b_pad))
    ref = reference(x, y, t, raw)
    assert out.shape == (N, HIDDEN), out.shape
    assert float(jnp.max(jnp.abs(out - ref))) < 1e-4, float(jnp.max(jnp.abs(out - ref)))

    # Larger, non-multiple batch: exercises the 2048-row tile bucket and the
    # clipped boundary block on the output.
    N2 = 1030
    kx2, ky2, kt2 = jax.random.split(jax.random.PRNGKey(1), 3)
    x2 = jax.random.normal(kx2, (N2, 1), jnp.float32)
    y2 = jax.random.normal(ky2, (N2, 1), jnp.float32)
    t2 = jax.random.uniform(kt2, (N2, 1), jnp.float32)
    out2 = jax.block_until_ready(net_trunk_pallas(x2, y2, t2, w0_pad, wh_pad, b_pad))
    ref2 = reference(x2, y2, t2, raw)
    assert out2.shape == (N2, HIDDEN), out2.shape
    assert float(jnp.max(jnp.abs(out2 - ref2))) < 1e-4, float(jnp.max(jnp.abs(out2 - ref2)))

    # Multi-step grid test (N > tile) to exercise the "parallel" batch axis.
    N3 = 4100
    kx3, ky3, kt3 = jax.random.split(jax.random.PRNGKey(2), 3)
    x3 = jax.random.normal(kx3, (N3, 1), jnp.float32)
    y3 = jax.random.normal(ky3, (N3, 1), jnp.float32)
    t3 = jax.random.uniform(kt3, (N3, 1), jnp.float32)
    out3 = jax.block_until_ready(net_trunk_pallas(x3, y3, t3, w0_pad, wh_pad, b_pad))
    ref3 = reference(x3, y3, t3, raw)
    assert out3.shape == (N3, HIDDEN), out3.shape
    assert float(jnp.max(jnp.abs(out3 - ref3))) < 1e-4, float(jnp.max(jnp.abs(out3 - ref3)))

    print("KERNEL_OK")
</pallas_src>

<mosaic_0001>
module attributes {stable_mosaic.version = 11 : i64} {
  func.func @_trunk_kernel(%arg0: i32, %arg1: memref<16x3xf32, #tpu.memory_space<vmem>>, %arg2: memref<3x128xf32, #tpu.memory_space<vmem>>, %arg3: memref<7x128x128xf32, #tpu.memory_space<vmem>>, %arg4: memref<8x128xf32, #tpu.memory_space<vmem>>, %arg5: memref<16x120xf32, #tpu.memory_space<vmem>>) attributes {dimension_semantics = [#tpu.dimension_semantics<parallel>], iteration_bounds = array<i64: 1>, scalar_prefetch = 0 : i64, scratch_operands = 0 : i64, tpu.core_type = #tpu.core_type<tc>, window_params = [{transform_indices = @transform_0, window_bounds = array<i64: 16, 3>}, {pipeline_mode = #tpu.pipeline_mode<synchronous>, transform_indices = @transform_1, window_bounds = array<i64: 3, 128>}, {pipeline_mode = #tpu.pipeline_mode<synchronous>, transform_indices = @transform_2, window_bounds = array<i64: 7, 128, 128>}, {pipeline_mode = #tpu.pipeline_mode<synchronous>, transform_indices = @transform_3, window_bounds = array<i64: 8, 128>}, {transform_indices = @transform_4, window_bounds = array<i64: 16, 120>}]} {
    %c0 = arith.constant 0 : index
    %c0_0 = arith.constant 0 : index
    %0 = vector.load %arg1[%c0, %c0_0] : memref<16x3xf32, #tpu.memory_space<vmem>>, vector<16x1xf32>
    %c0_1 = arith.constant 0 : index
    %c1 = arith.constant 1 : index
    %1 = vector.load %arg1[%c0_1, %c1] : memref<16x3xf32, #tpu.memory_space<vmem>>, vector<16x1xf32>
    %c0_2 = arith.constant 0 : index
    %c2 = arith.constant 2 : index
    %2 = vector.load %arg1[%c0_2, %c2] : memref<16x3xf32, #tpu.memory_space<vmem>>, vector<16x1xf32>
    %c0_3 = arith.constant 0 : index
    %c0_4 = arith.constant 0 : index
    %3 = vector.load %arg2[%c0_3, %c0_4] : memref<3x128xf32, #tpu.memory_space<vmem>>, vector<1x128xf32>
    %4 = vector.shape_cast %3 : vector<1x128xf32> to vector<128xf32>
    %5 = vector.shape_cast %4 : vector<128xf32> to vector<1x128xf32>
    %6 = vector.broadcast %0 : vector<16x1xf32> to vector<16x128xf32>
    %7 = vector.broadcast %5 : vector<1x128xf32> to vector<16x128xf32>
    %8 = arith.mulf %6, %7 : vector<16x128xf32>
    %c1_5 = arith.constant 1 : index
    %c0_6 = arith.constant 0 : index
    %9 = vector.load %arg2[%c1_5, %c0_6] : memref<3x128xf32, #tpu.memory_space<vmem>>, vector<1x128xf32>
    %10 = vector.shape_cast %9 : vector<1x128xf32> to vector<128xf32>
    %11 = vector.shape_cast %10 : vector<128xf32> to vector<1x128xf32>
    %12 = vector.broadcast %1 : vector<16x1xf32> to vector<16x128xf32>
    %13 = vector.broadcast %11 : vector<1x128xf32> to vector<16x128xf32>
    %14 = arith.mulf %12, %13 : vector<16x128xf32>
    %15 = arith.addf %8, %14 : vector<16x128xf32>
    %c2_7 = arith.constant 2 : index
    %c0_8 = arith.constant 0 : index
    %16 = vector.load %arg2[%c2_7, %c0_8] : memref<3x128xf32, #tpu.memory_space<vmem>>, vector<1x128xf32>
    %17 = vector.shape_cast %16 : vector<1x128xf32> to vector<128xf32>
    %18 = vector.shape_cast %17 : vector<128xf32> to vector<1x128xf32>
    %19 = vector.broadcast %2 : vector<16x1xf32> to vector<16x128xf32>
    %20 = vector.broadcast %18 : vector<1x128xf32> to vector<16x128xf32>
    %21 = arith.mulf %19, %20 : vector<16x128xf32>
    %22 = arith.addf %15, %21 : vector<16x128xf32>
    %c0_9 = arith.constant 0 : index
    %c0_10 = arith.constant 0 : index
    %23 = vector.load %arg4[%c0_9, %c0_10] : memref<8x128xf32, #tpu.memory_space<vmem>>, vector<1x128xf32>
    %24 = vector.shape_cast %23 : vector<1x128xf32> to vector<128xf32>
    %25 = vector.shape_cast %24 : vector<128xf32> to vector<1x128xf32>
    %26 = vector.broadcast %25 : vector<1x128xf32> to vector<16x128xf32>
    %27 = arith.addf %22, %26 : vector<16x128xf32>
    %28 = math.tanh %27 : vector<16x128xf32>
    %c0_11 = arith.constant 0 : index
    %c0_12 = arith.constant 0 : index
    %c0_13 = arith.constant 0 : index
    %29 = vector.load %arg3[%c0_11, %c0_12, %c0_13] : memref<7x128x128xf32, #tpu.memory_space<vmem>>, vector<1x128x128xf32>
    %30 = vector.shape_cast %29 : vector<1x128x128xf32> to vector<128x128xf32>
    %cst = arith.constant dense<0.000000e+00> : vector<16x128xf32>
    %31 = tpu.matmul %28, %30, %cst {dimension_numbers = #tpu.dot_dimension_numbers<[1], [0], [0], [1], [0, 0, 1, 1], [], []>} : vector<16x128xf32>, vector<128x128xf32>, vector<16x128xf32> -> vector<16x128xf32>
    %c1_14 = arith.constant 1 : index
    %c0_15 = arith.constant 0 : index
    %32 = vector.load %arg4[%c1_14, %c0_15] : memref<8x128xf32, #tpu.memory_space<vmem>>, vector<1x128xf32>
    %33 = vector.shape_cast %32 : vector<1x128xf32> to vector<128xf32>
    %34 = vector.shape_cast %33 : vector<128xf32> to vector<1x128xf32>
    %35 = vector.broadcast %34 : vector<1x128xf32> to vector<16x128xf32>
    %36 = arith.addf %31, %35 : vector<16x128xf32>
    %37 = math.tanh %36 : vector<16x128xf32>
    %c1_16 = arith.constant 1 : index
    %c0_17 = arith.constant 0 : index
    %c0_18 = arith.constant 0 : index
    %38 = vector.load %arg3[%c1_16, %c0_17, %c0_18] : memref<7x128x128xf32, #tpu.memory_space<vmem>>, vector<1x128x128xf32>
    %39 = vector.shape_cast %38 : vector<1x128x128xf32> to vector<128x128xf32>
    %cst_19 = arith.constant dense<0.000000e+00> : vector<16x128xf32>
    %40 = tpu.matmul %37, %39, %cst_19 {dimension_numbers = #tpu.dot_dimension_numbers<[1], [0], [0], [1], [0, 0, 1, 1], [], []>} : vector<16x128xf32>, vector<128x128xf32>, vector<16x128xf32> -> vector<16x128xf32>
    %c2_20 = arith.constant 2 : index
    %c0_21 = arith.constant 0 : index
    %41 = vector.load %arg4[%c2_20, %c0_21] : memref<8x128xf32, #tpu.memory_space<vmem>>, vector<1x128xf32>
    %42 = vector.shape_cast %41 : vector<1x128xf32> to vector<128xf32>
    %43 = vector.shape_cast %42 : vector<128xf32> to vector<1x128xf32>
    %44 = vector.broadcast %43 : vector<1x128xf32> to vector<16x128xf32>
    %45 = arith.addf %40, %44 : vector<16x128xf32>
    %46 = math.tanh %45 : vector<16x128xf32>
    %c2_22 = arith.constant 2 : index
    %c0_23 = arith.constant 0 : index
    %c0_24 = arith.constant 0 : index
    %47 = vector.load %arg3[%c2_22, %c0_23, %c0_24] : memref<7x128x128xf32, #tpu.memory_space<vmem>>, vector<1x128x128xf32>
    %48 = vector.shape_cast %47 : vector<1x128x128xf32> to vector<128x128xf32>
    %cst_25 = arith.constant dense<0.000000e+00> : vector<16x128xf32>
    %49 = tpu.matmul %46, %48, %cst_25 {dimension_numbers = #tpu.dot_dimension_numbers<[1], [0], [0], [1], [0, 0, 1, 1], [], []>} : vector<16x128xf32>, vector<128x128xf32>, vector<16x128xf32> -> vector<16x128xf32>
    %c3 = arith.constant 3 : index
    %c0_26 = arith.constant 0 : index
    %50 = vector.load %arg4[%c3, %c0_26] : memref<8x128xf32, #tpu.memory_space<vmem>>, vector<1x128xf32>
    %51 = vector.shape_cast %50 : vector<1x128xf32> to vector<128xf32>
    %52 = vector.shape_cast %51 : vector<128xf32> to vector<1x128xf32>
    %53 = vector.broadcast %52 : vector<1x128xf32> to vector<16x128xf32>
    %54 = arith.addf %49, %53 : vector<16x128xf32>
    %55 = math.tanh %54 : vector<16x128xf32>
    %c3_27 = arith.constant 3 : index
    %c0_28 = arith.constant 0 : index
    %c0_29 = arith.constant 0 : index
    %56 = vector.load %arg3[%c3_27, %c0_28, %c0_29] : memref<7x128x128xf32, #tpu.memory_space<vmem>>, vector<1x128x128xf32>
    %57 = vector.shape_cast %56 : vector<1x128x128xf32> to vector<128x128xf32>
    %cst_30 = arith.constant dense<0.000000e+00> : vector<16x128xf32>
    %58 = tpu.matmul %55, %57, %cst_30 {dimension_numbers = #tpu.dot_dimension_numbers<[1], [0], [0], [1], [0, 0, 1, 1], [], []>} : vector<16x128xf32>, vector<128x128xf32>, vector<16x128xf32> -> vector<16x128xf32>
    %c4 = arith.constant 4 : index
    %c0_31 = arith.constant 0 : index
    %59 = vector.load %arg4[%c4, %c0_31] : memref<8x128xf32, #tpu.memory_space<vmem>>, vector<1x128xf32>
    %60 = vector.shape_cast %59 : vector<1x128xf32> to vector<128xf32>
    %61 = vector.shape_cast %60 : vector<128xf32> to vector<1x128xf32>
    %62 = vector.broadcast %61 : vector<1x128xf32> to vector<16x128xf32>
    %63 = arith.addf %58, %62 : vector<16x128xf32>
    %64 = math.tanh %63 : vector<16x128xf32>
    %c4_32 = arith.constant 4 : index
    %c0_33 = arith.constant 0 : index
    %c0_34 = arith.constant 0 : index
    %65 = vector.load %arg3[%c4_32, %c0_33, %c0_34] : memref<7x128x128xf32, #tpu.memory_space<vmem>>, vector<1x128x128xf32>
    %66 = vector.shape_cast %65 : vector<1x128x128xf32> to vector<128x128xf32>
    %cst_35 = arith.constant dense<0.000000e+00> : vector<16x128xf32>
    %67 = tpu.matmul %64, %66, %cst_35 {dimension_numbers = #tpu.dot_dimension_numbers<[1], [0], [0], [1], [0, 0, 1, 1], [], []>} : vector<16x128xf32>, vector<128x128xf32>, vector<16x128xf32> -> vector<16x128xf32>
    %c5 = arith.constant 5 : index
    %c0_36 = arith.constant 0 : index
    %68 = vector.load %arg4[%c5, %c0_36] : memref<8x128xf32, #tpu.memory_space<vmem>>, vector<1x128xf32>
    %69 = vector.shape_cast %68 : vector<1x128xf32> to vector<128xf32>
    %70 = vector.shape_cast %69 : vector<128xf32> to vector<1x128xf32>
    %71 = vector.broadcast %70 : vector<1x128xf32> to vector<16x128xf32>
    %72 = arith.addf %67, %71 : vector<16x128xf32>
    %73 = math.tanh %72 : vector<16x128xf32>
    %c5_37 = arith.constant 5 : index
    %c0_38 = arith.constant 0 : index
    %c0_39 = arith.constant 0 : index
    %74 = vector.load %arg3[%c5_37, %c0_38, %c0_39] : memref<7x128x128xf32, #tpu.memory_space<vmem>>, vector<1x128x128xf32>
    %75 = vector.shape_cast %74 : vector<1x128x128xf32> to vector<128x128xf32>
    %cst_40 = arith.constant dense<0.000000e+00> : vector<16x128xf32>
    %76 = tpu.matmul %73, %75, %cst_40 {dimension_numbers = #tpu.dot_dimension_numbers<[1], [0], [0], [1], [0, 0, 1, 1], [], []>} : vector<16x128xf32>, vector<128x128xf32>, vector<16x128xf32> -> vector<16x128xf32>
    %c6 = arith.constant 6 : index
    %c0_41 = arith.constant 0 : index
    %77 = vector.load %arg4[%c6, %c0_41] : memref<8x128xf32, #tpu.memory_space<vmem>>, vector<1x128xf32>
    %78 = vector.shape_cast %77 : vector<1x128xf32> to vector<128xf32>
    %79 = vector.shape_cast %78 : vector<128xf32> to vector<1x128xf32>
    %80 = vector.broadcast %79 : vector<1x128xf32> to vector<16x128xf32>
    %81 = arith.addf %76, %80 : vector<16x128xf32>
    %82 = math.tanh %81 : vector<16x128xf32>
    %c6_42 = arith.constant 6 : index
    %c0_43 = arith.constant 0 : index
    %c0_44 = arith.constant 0 : index
    %83 = vector.load %arg3[%c6_42, %c0_43, %c0_44] : memref<7x128x128xf32, #tpu.memory_space<vmem>>, vector<1x128x128xf32>
    %84 = vector.shape_cast %83 : vector<1x128x128xf32> to vector<128x128xf32>
    %cst_45 = arith.constant dense<0.000000e+00> : vector<16x128xf32>
    %85 = tpu.matmul %82, %84, %cst_45 {dimension_numbers = #tpu.dot_dimension_numbers<[1], [0], [0], [1], [0, 0, 1, 1], [], []>} : vector<16x128xf32>, vector<128x128xf32>, vector<16x128xf32> -> vector<16x128xf32>
    %c7 = arith.constant 7 : index
    %c0_46 = arith.constant 0 : index
    %86 = vector.load %arg4[%c7, %c0_46] : memref<8x128xf32, #tpu.memory_space<vmem>>, vector<1x128xf32>
    %87 = vector.shape_cast %86 : vector<1x128xf32> to vector<128xf32>
    %88 = vector.shape_cast %87 : vector<128xf32> to vector<1x128xf32>
    %89 = vector.broadcast %88 : vector<1x128xf32> to vector<16x128xf32>
    %90 = arith.addf %85, %89 : vector<16x128xf32>
    %91 = vector.extract_strided_slice %90 {offsets = [0, 0], sizes = [16, 120], strides = [1, 1]} : vector<16x128xf32> to vector<16x120xf32>
    %c0_47 = arith.constant 0 : index
    %c0_48 = arith.constant 0 : index
    %92 = vector.load %arg5[%c0_47, %c0_48] : memref<16x120xf32, #tpu.memory_space<vmem>>, vector<16x120xf32>
    tpu.vector_store %arg5[%c0_47, %c0_48], %91 {strides = array<i32>} : memref<16x120xf32, #tpu.memory_space<vmem>>, vector<16x120xf32>,
    return
  }
  func.func @transform_0(%arg0: i32) -> (i32, i32) {
    %c0_i32 = arith.constant 0 : i32
    %c0_i32_0 = arith.constant 0 : i32
    return %arg0, %c0_i32 : i32, i32
  }
  func.func @transform_1(%arg0: i32) -> (i32, i32) {
    %c0_i32 = arith.constant 0 : i32
    %c0_i32_0 = arith.constant 0 : i32
    %c0_i32_1 = arith.constant 0 : i32
    return %c0_i32, %c0_i32_0 : i32, i32
  }
  func.func @transform_2(%arg0: i32) -> (i32, i32, i32) {
    %c0_i32 = arith.constant 0 : i32
    %c0_i32_0 = arith.constant 0 : i32
    %c0_i32_1 = arith.constant 0 : i32
    %c0_i32_2 = arith.constant 0 : i32
    return %c0_i32, %c0_i32_0, %c0_i32_1 : i32, i32, i32
  }
  func.func @transform_3(%arg0: i32) -> (i32, i32) {
    %c0_i32 = arith.constant 0 : i32
    %c0_i32_0 = arith.constant 0 : i32
    %c0_i32_1 = arith.constant 0 : i32
    return %c0_i32, %c0_i32_0 : i32, i32
  }
  func.func @transform_4(%arg0: i32) -> (i32, i32) {
    %c0_i32 = arith.constant 0 : i32
    %c0_i32_0 = arith.constant 0 : i32
    return %arg0, %c0_i32 : i32, i32
  }
}

</mosaic_0001>

<llo_original>
// kernel: _net_trunk_call.1
$region0: #{_net_trunk_call.1}
  #allocation0 [shape = 'u32[]', space=smem, size = 0x4, offset = 0x4, fixed_abs, tag = 'smem constant byte address 0x4 - core index']
  #allocation1 [shape = 'u32[144,128]{1,0:T(1,128)}', space=vmem, size = 0x12000, scoped, tag = 'internal scratch']
  %s0 = inlined_call_operand.vmem [shape: f32[16,3], index: 0, kind: input, shape index: {}]
  %s1 = inlined_call_operand.vmem [shape: f32[3,128], index: 1, kind: input, shape index: {}]
  %s2 = inlined_call_operand.hbm [shape: f32[7,128,128], index: 2, kind: input, shape index: {}]
  %s3 = inlined_call_operand.vmem [shape: f32[8,128], index: 3, kind: input, shape index: {}]
  %s4 = inlined_call_operand.hbm [shape: f32[16,120], index: 4, kind: output, shape index: {}]
  %s5 = sld [smem:[#allocation0]]
  $region30: #{_net_trunk_call.1} parent=0
    _
  %s7 = ssub.s32 1, %s5
  %s8 = scalar_select 0, %s7, %s5
  $region1: #{_net_trunk_call.1} parent=0
    #allocation2 [shape = 'u8[458752]{0}', space=vmem, size = 0x70000, scoped, tag = 'input window, operand 2, single buffered']
    #allocation3 [shape = 's32[1]{0}', space=sflag, size = 0x4, scoped, tag = 'scoped memory for _net_trunk_call.1']
    #allocation4 [shape = 's32[1]{0}', space=sflag, size = 0x4, scoped, tag = 'scoped memory for _net_trunk_call.1']
    #allocation5 [shape = 'u8[8192]{0}', space=vmem, size = 0x2000, scoped, tag = 'output window, operand 0, single buffered']
    %9 = vsyncpa [#allocation3], 0
    %10 = vsyncpa [#allocation4], 0
    // Predicated region
    $region2: #{_net_trunk_call.1} parent=1 // pred_check
      _
    $region3: #{_net_trunk_call.1} parent=1 // pred_check_branch
      %12 = sbr.rel (0) target = $region5
    $region4: #{_net_trunk_call.1} parent=1 // pred_region
      _
    $region5: #{_net_trunk_call.1} parent=1 // pred_fallthru
      _
    // Predicated region
    $region6: #{_net_trunk_call.1} parent=1 // pred_check
      _
    $region7: #{_net_trunk_call.1} parent=1 // pred_check_branch
      %14 = sbr.rel (0) target = $region9
    $region8: #{_net_trunk_call.1} parent=1 // pred_region
      _
    $region9: #{_net_trunk_call.1} parent=1 // pred_fallthru
      _
    // Predicated region
    $region10: #{_net_trunk_call.1} parent=1 // pred_check
      _
    $region11: #{_net_trunk_call.1} parent=1 // pred_check_branch
      %16 = sbr.rel (0) target = $region13
    $region12: #{_net_trunk_call.1} parent=1 // pred_region
      %s18 = ssub.s32 14336, 14336
      %19 = vsyncadd [#allocation3], %s18
      %s20 = sshll.u32 [#allocation2], 4
      %s21 = int_to_ptr.vmem [resolvable:$true] %s20
      %26 = dma.hbm_to_vmem [thread:$0]  %s2, 14336, %s21, [#allocation3], 128, 128, 8
    $region13: #{_net_trunk_call.1} parent=1 // pred_fallthru
      _
    // Predicated region
    $region14: #{_net_trunk_call.1} parent=1 // pred_check
      _
    $region15: #{_net_trunk_call.1} parent=1 // pred_check_branch
      %28 = sbr.rel (0) target = $region17
    $region16: #{_net_trunk_call.1} parent=1 // pred_region
      _
    $region17: #{_net_trunk_call.1} parent=1 // pred_fallthru
      _
    // Predicated region
    $region18: #{_net_trunk_call.1} parent=1 // pred_check
      _
    $region19: #{_net_trunk_call.1} parent=1 // pred_check_branch
      %30 = sbr.rel (0) target = $region21
    $region20: #{_net_trunk_call.1} parent=1 // pred_region
      %31 = dma.done [#allocation3], 14336
    $region21: #{_net_trunk_call.1} parent=1 // pred_fallthru
      _
    %v32 = vld [vmem:[%s0] sm:$0xff]
    %v33 = vld [vmem:[%s0 + $0x8] sm:$0xff]
    %v34 = vld [vmem:[%s1] sm:$0x1]
    %36 = vset.pattern.permute.xlu0 0
    %37 = vperm.xlu0 %36, %v32
    %v38 = vpop.permute.xlu0 %37
    %41 = vset.pattern.permute.xlu0 0
    %42 = vperm.xlu0 %41, %v33
    %v43 = vpop.permute.xlu0 %42
    %v45 = vlaneseq
    %v46 = vshrl.u32 %v45, 7
    %v47 = vsub.s32 0, %v46
    %v48 = vrot.slane %v34, %v47
    %v49 = vmul.f32 %v38, %v48
    %v50 = vmul.f32 %v43, %v48
    %v51 = vld [vmem:[%s1 + $0x1] sm:$0x1]
    %52 = vset.pattern.permute.xlu0 1
    %53 = vperm.xlu0 %52, %v32
    %v54 = vpop.permute.xlu0 %53
    %56 = vset.pattern.permute.xlu0 1
    %57 = vperm.xlu0 %56, %v33
    %v58 = vpop.permute.xlu0 %57
    %v60 = vlaneseq
    %v61 = vshrl.u32 %v60, 7
    %v62 = vsub.s32 0, %v61
    %v63 = vrot.slane %v51, %v62
    %v64 = vmul.f32 %v54, %v63
    %v65 = vmul.f32 %v58, %v63
    %v66 = vadd.f32 %v49, %v64
    %v67 = vadd.f32 %v50, %v65
    %v68 = vld [vmem:[%s1 + $0x2] sm:$0x1]
    %69 = vset.pattern.permute.xlu0 2
    %70 = vperm.xlu0 %69, %v32
    %v71 = vpop.permute.xlu0 %70
    %73 = vset.pattern.permute.xlu0 2
    %74 = vperm.xlu0 %73, %v33
    %v75 = vpop.permute.xlu0 %74
    %v77 = vlaneseq
    %v78 = vshrl.u32 %v77, 7
    %v79 = vsub.s32 0, %v78
    %v80 = vrot.slane %v68, %v79
    %v81 = vmul.f32 %v71, %v80
    %v82 = vmul.f32 %v75, %v80
    %v83 = vadd.f32 %v66, %v81
    %v84 = vadd.f32 %v67, %v82
    %v85 = vld [vmem:[%s3] sm:$0x1]
    %v86 = vlaneseq
    %v87 = vshrl.u32 %v86, 7
    %v88 = vsub.s32 0, %v87
    %v89 = vrot.slane %v85, %v88
    %v90 = vadd.f32 %v83, %v89
    %v91 = vadd.f32 %v84, %v89
    %v92 = vtanh.pop %v90
    %v93 = vtanh.pop %v91
    %v94 = vld [vmem:[#allocation2] sm:$0xff]
    %v95 = vld [vmem:[#allocation2 + $0x8] sm:$0xff]
    %v96 = vld [vmem:[#allocation2 + $0x10] sm:$0xff]
    %v97 = vld [vmem:[#allocation2 + $0x18] sm:$0xff]
    %v98 = vld [vmem:[#allocation2 + $0x20] sm:$0xff]
    %v99 = vld [vmem:[#allocation2 + $0x28] sm:$0xff]
    %v100 = vld [vmem:[#allocation2 + $0x30] sm:$0xff]
    %v101 = vld [vmem:[#allocation2 + $0x38] sm:$0xff]
    %v102 = vld [vmem:[#allocation2 + $0x40] sm:$0xff]
    %v103 = vld [vmem:[#allocation2 + $0x48] sm:$0xff]
    %v104 = vld [vmem:[#allocation2 + $0x50] sm:$0xff]
    %v105 = vld [vmem:[#allocation2 + $0x58] sm:$0xff]
    %v106 = vld [vmem:[#allocation2 + $0x60] sm:$0xff]
    %v107 = vld [vmem:[#allocation2 + $0x68] sm:$0xff]
    %v108 = vld [vmem:[#allocation2 + $0x70] sm:$0xff]
    %v109 = vld [vmem:[#allocation2 + $0x78] sm:$0xff]
    %v110 = vld [vmem:[%s3 + $0x1] sm:$0x1]
    %v111 = vlaneseq
    %v112 = vshrl.u32 %v111, 7
    %v113 = vsub.s32 0, %v112
    %v114 = vrot.slane %v110, %v113
    %115 = vmatprep.subr.mxu0 0.0
    %116 = vmatpush1.msra.mxu0 %v94
    %117 = vmatprep.subr.mxu0 0.0
    %118 = vmatpush1.msra.mxu0 %v95
    %119 = vmatprep.subr.mxu0 0.0
    %120 = vmatpush1.msra.mxu0 %v96
    %121 = vmatprep.subr.mxu0 0.0
    %122 = vmatpush1.msra.mxu0 %v97
    %123 = vmatprep.subr.mxu0 0.0
    %124 = vmatpush1.msra.mxu0 %v98
    %125 = vmatprep.subr.mxu0 0.0
    %126 = vmatpush1.msra.mxu0 %v99
    %127 = vmatprep.subr.mxu0 0.0
    %128 = vmatpush1.msra.mxu0 %v100
    %129 = vmatprep.subr.mxu0 0.0
    %130 = vmatpush1.msra.mxu0 %v101
    %131 = vmatprep.subr.mxu0 0.0
    %132 = vmatpush1.msra.mxu0 %v102
    %133 = vmatprep.subr.mxu0 0.0
    %134 = vmatpush1.msra.mxu0 %v103
    %135 = vmatprep.subr.mxu0 0.0
    %136 = vmatpush1.msra.mxu0 %v104
    %137 = vmatprep.subr.mxu0 0.0
    %138 = vmatpush1.msra.mxu0 %v105
    %139 = vmatprep.subr.mxu0 0.0
    %140 = vmatpush1.msra.mxu0 %v106
    %141 = vmatprep.subr.mxu0 0.0
    %142 = vmatpush1.msra.mxu0 %v107
    %143 = vmatprep.subr.mxu0 0.0
    %144 = vmatpush1.msra.mxu0 %v108
    %145 = vmatprep.subr.mxu0 0.0
    %146 = vmatpush1.msra.mxu0 %v109
    %147 = vmatprep.subr.mxu0 0.0
    %148 = vmatpush1.msra.mxu0 0.0
    %149 = vmatprep.subr.mxu0 0.0
    %150 = vmatpush1.msra.mxu0 0.0
    %151 = vmatprep.subr.mxu0 0.0
    %152 = vmatpush1.msra.mxu0 0.0
    %153 = vmatprep.subr.mxu0 0.0
    %154 = vmatpush1.msra.mxu0 0.0
    %155 = vmatprep.subr.mxu0 0.0
    %156 = vmatpush1.msra.mxu0 0.0
    %157 = vmatprep.subr.mxu0 0.0
    %158 = vmatpush1.msra.mxu0 0.0
    %159 = vmatprep.subr.mxu0 0.0
    %160 = vmatpush1.msra.mxu0 0.0
    %161 = vmatprep.subr.mxu0 0.0
    %162 = vmatpush1.msra.mxu0 0.0
    %163 = vmatprep.subr.mxu0 0.0
    %164 = vmatpush1.msra.mxu0 0.0
    %165 = vmatprep.subr.mxu0 0.0
    %166 = vmatpush1.msra.mxu0 0.0
    %167 = vmatprep.subr.mxu0 0.0
    %168 = vmatpush1.msra.mxu0 0.0
    %169 = vmatprep.subr.mxu0 0.0
    %170 = vmatpush1.msra.mxu0 0.0
    %171 = vmatprep.subr.mxu0 0.0
    %172 = vmatpush1.msra.mxu0 0.0
    %173 = vmatprep.subr.mxu0 0.0
    %174 = vmatpush1.msra.mxu0 0.0
    %175 = vmatprep.subr.mxu0 0.0
    %176 = vmatpush1.msra.mxu0 0.0
    %177 = vmatprep.subr.mxu0 0.0
    %178 = vmatpush1.msra.mxu0 0.0
    %179 = vmatprep.mubr.f32.mxu0 0.0
    %180 = vmatmul.mubr.f32.gmra.mrb[0].mxu0 %v92
    %v181 = vpop.f32.mrb[0].mxu0
    %v182 = vadd.f32 %v114, %v181
    %v183 = vpop.f32.mrb[0].mxu0
    %184 = vmatprep.mubr.f32.mxu0 0.0
    %185 = vmatmul.mubr.f32.gmra.mrb[0].mxu0 %v93
    %v186 = vpop.f32.mrb[0].mxu0
    %v187 = vadd.f32 %v114, %v186
    %v188 = vpop.f32.mrb[0].mxu0
    %189 = vdwg.mxu0
    %v190 = vtanh.pop %v182
    %v191 = vtanh.pop %v187
    %s192 = scalar_lea.vmem [#allocation2], 128
    %v193 = vld [vmem:[%s192] sm:$0xff]
    %v194 = vld [vmem:[%s192 + $0x8] sm:$0xff]
    %v195 = vld [vmem:[%s192 + $0x10] sm:$0xff]
    %v196 = vld [vmem:[%s192 + $0x18] sm:$0xff]
    %v197 = vld [vmem:[%s192 + $0x20] sm:$0xff]
    %v198 = vld [vmem:[%s192 + $0x28] sm:$0xff]
    %v199 = vld [vmem:[%s192 + $0x30] sm:$0xff]
    %v200 = vld [vmem:[%s192 + $0x38] sm:$0xff]
    %v201 = vld [vmem:[%s192 + $0x40] sm:$0xff]
    %v202 = vld [vmem:[%s192 + $0x48] sm:$0xff]
    %v203 = vld [vmem:[%s192 + $0x50] sm:$0xff]
    %v204 = vld [vmem:[%s192 + $0x58] sm:$0xff]
    %v205 = vld [vmem:[%s192 + $0x60] sm:$0xff]
    %v206 = vld [vmem:[%s192 + $0x68] sm:$0xff]
    %v207 = vld [vmem:[%s192 + $0x70] sm:$0xff]
    %v208 = vld [vmem:[%s192 + $0x78] sm:$0xff]
    %v209 = vld [vmem:[%s3 + $0x2] sm:$0x1]
    %v210 = vlaneseq
    %v211 = vshrl.u32 %v210, 7
    %v212 = vsub.s32 0, %v211
    %v213 = vrot.slane %v209, %v212
    %214 = vmatprep.subr.mxu0 0.0
    %215 = vmatpush1.msra.mxu0 %v193
    %216 = vmatprep.subr.mxu0 0.0
    %217 = vmatpush1.msra.mxu0 %v194
    %218 = vmatprep.subr.mxu0 0.0
    %219 = vmatpush1.msra.mxu0 %v195
    %220 = vmatprep.subr.mxu0 0.0
    %221 = vmatpush1.msra.mxu0 %v196
    %222 = vmatprep.subr.mxu0 0.0
    %223 = vmatpush1.msra.mxu0 %v197
    %224 = vmatprep.subr.mxu0 0.0
    %225 = vmatpush1.msra.mxu0 %v198
    %226 = vmatprep.subr.mxu0 0.0
    %227 = vmatpush1.msra.mxu0 %v199
    %228 = vmatprep.subr.mxu0 0.0
    %229 = vmatpush1.msra.mxu0 %v200
    %230 = vmatprep.subr.mxu0 0.0
    %231 = vmatpush1.msra.mxu0 %v201
    %232 = vmatprep.subr.mxu0 0.0
    %233 = vmatpush1.msra.mxu0 %v202
    %234 = vmatprep.subr.mxu0 0.0
    %235 = vmatpush1.msra.mxu0 %v203
    %236 = vmatprep.subr.mxu0 0.0
    %237 = vmatpush1.msra.mxu0 %v204
    %238 = vmatprep.subr.mxu0 0.0
    %239 = vmatpush1.msra.mxu0 %v205
    %240 = vmatprep.subr.mxu0 0.0
    %241 = vmatpush1.msra.mxu0 %v206
    %242 = vmatprep.subr.mxu0 0.0
    %243 = vmatpush1.msra.mxu0 %v207
    %244 = vmatprep.subr.mxu0 0.0
    %245 = vmatpush1.msra.mxu0 %v208
    %246 = vmatprep.subr.mxu0 0.0
    %247 = vmatpush1.msra.mxu0 0.0
    %248 = vmatprep.subr.mxu0 0.0
    %249 = vmatpush1.msra.mxu0 0.0
    %250 = vmatprep.subr.mxu0 0.0
    %251 = vmatpush1.msra.mxu0 0.0
    %252 = vmatprep.subr.mxu0 0.0
    %253 = vmatpush1.msra.mxu0 0.0
    %254 = vmatprep.subr.mxu0 0.0
    %255 = vmatpush1.msra.mxu0 0.0
    %256 = vmatprep.subr.mxu0 0.0
    %257 = vmatpush1.msra.mxu0 0.0
    %258 = vmatprep.subr.mxu0 0.0
    %259 = vmatpush1.msra.mxu0 0.0
    %260 = vmatprep.subr.mxu0 0.0
    %261 = vmatpush1.msra.mxu0 0.0
    %262 = vmatprep.subr.mxu0 0.0
    %263 = vmatpush1.msra.mxu0 0.0
    %264 = vmatprep.subr.mxu0 0.0
    %265 = vmatpush1.msra.mxu0 0.0
    %266 = vmatprep.subr.mxu0 0.0
    %267 = vmatpush1.msra.mxu0 0.0
    %268 = vmatprep.subr.mxu0 0.0
    %269 = vmatpush1.msra.mxu0 0.0
    %270 = vmatprep.subr.mxu0 0.0
    %271 = vmatpush1.msra.mxu0 0.0
    %272 = vmatprep.subr.mxu0 0.0
    %273 = vmatpush1.msra.mxu0 0.0
    %274 = vmatprep.subr.mxu0 0.0
    %275 = vmatpush1.msra.mxu0 0.0
    %276 = vmatprep.subr.mxu0 0.0
    %277 = vmatpush1.msra.mxu0 0.0
    %278 = vmatprep.mubr.f32.mxu0 0.0
    %279 = vmatmul.mubr.f32.gmra.mrb[0].mxu0 %v190
    %v280 = vpop.f32.mrb[0].mxu0
    %v281 = vadd.f32 %v213, %v280
    %v282 = vpop.f32.mrb[0].mxu0
    %283 = vmatprep.mubr.f32.mxu0 0.0
    %284 = vmatmul.mubr.f32.gmra.mrb[0].mxu0 %v191
    %v285 = vpop.f32.mrb[0].mxu0
    %v286 = vadd.f32 %v213, %v285
    %v287 = vpop.f32.mrb[0].mxu0
    %288 = vdwg.mxu0
    %v289 = vtanh.pop %v281
    %v290 = vtanh.pop %v286
    %s291 = scalar_lea.vmem [#allocation2], 256
    %v292 = vld [vmem:[%s291] sm:$0xff]
    %v293 = vld [vmem:[%s291 + $0x8] sm:$0xff]
    %v294 = vld [vmem:[%s291 + $0x10] sm:$0xff]
    %v295 = vld [vmem:[%s291 + $0x18] sm:$0xff]
    %v296 = vld [vmem:[%s291 + $0x20] sm:$0xff]
    %v297 = vld [vmem:[%s291 + $0x28] sm:$0xff]
    %v298 = vld [vmem:[%s291 + $0x30] sm:$0xff]
    %v299 = vld [vmem:[%s291 + $0x38] sm:$0xff]
    %v300 = vld [vmem:[%s291 + $0x40] sm:$0xff]
    %v301 = vld [vmem:[%s291 + $0x48] sm:$0xff]
    %v302 = vld [vmem:[%s291 + $0x50] sm:$0xff]
    %v303 = vld [vmem:[%s291 + $0x58] sm:$0xff]
    %v304 = vld [vmem:[%s291 + $0x60] sm:$0xff]
    %v305 = vld [vmem:[%s291 + $0x68] sm:$0xff]
    %v306 = vld [vmem:[%s291 + $0x70] sm:$0xff]
    %v307 = vld [vmem:[%s291 + $0x78] sm:$0xff]
    %v308 = vld [vmem:[%s3 + $0x3] sm:$0x1]
    %v309 = vlaneseq
    %v310 = vshrl.u32 %v309, 7
    %v311 = vsub.s32 0, %v310
    %v312 = vrot.slane %v308, %v311
    %313 = vmatprep.subr.mxu0 0.0
    %314 = vmatpush1.msra.mxu0 %v292
    %315 = vmatprep.subr.mxu0 0.0
    %316 = vmatpush1.msra.mxu0 %v293
    %317 = vmatprep.subr.mxu0 0.0
    %318 = vmatpush1.msra.mxu0 %v294
    %319 = vmatprep.subr.mxu0 0.0
    %320 = vmatpush1.msra.mxu0 %v295
    %321 = vmatprep.subr.mxu0 0.0
    %322 = vmatpush1.msra.mxu0 %v296
    %323 = vmatprep.subr.mxu0 0.0
    %324 = vmatpush1.msra.mxu0 %v297
    %325 = vmatprep.subr.mxu0 0.0
    %326 = vmatpush1.msra.mxu0 %v298
    %327 = vmatprep.subr.mxu0 0.0
    %328 = vmatpush1.msra.mxu0 %v299
    %329 = vmatprep.subr.mxu0 0.0
    %330 = vmatpush1.msra.mxu0 %v300
    %331 = vmatprep.subr.mxu0 0.0
    %332 = vmatpush1.msra.mxu0 %v301
    %333 = vmatprep.subr.mxu0 0.0
    %334 = vmatpush1.msra.mxu0 %v302
    %335 = vmatprep.subr.mxu0 0.0
    %336 = vmatpush1.msra.mxu0 %v303
    %337 = vmatprep.subr.mxu0 0.0
    %338 = vmatpush1.msra.mxu0 %v304
    %339 = vmatprep.subr.mxu0 0.0
    %340 = vmatpush1.msra.mxu0 %v305
    %341 = vmatprep.subr.mxu0 0.0
    %342 = vmatpush1.msra.mxu0 %v306
    %343 = vmatprep.subr.mxu0 0.0
    %344 = vmatpush1.msra.mxu0 %v307
    %345 = vmatprep.subr.mxu0 0.0
    %346 = vmatpush1.msra.mxu0 0.0
    %347 = vmatprep.subr.mxu0 0.0
    %348 = vmatpush1.msra.mxu0 0.0
    %349 = vmatprep.subr.mxu0 0.0
    %350 = vmatpush1.msra.mxu0 0.0
    %351 = vmatprep.subr.mxu0 0.0
    %352 = vmatpush1.msra.mxu0 0.0
    %353 = vmatprep.subr.mxu0 0.0
    %354 = vmatpush1.msra.mxu0 0.0
    %355 = vmatprep.subr.mxu0 0.0
    %356 = vmatpush1.msra.mxu0 0.0
    %357 = vmatprep.subr.mxu0 0.0
    %358 = vmatpush1.msra.mxu0 0.0
    %359 = vmatprep.subr.mxu0 0.0
    %360 = vmatpush1.msra.mxu0 0.0
    %361 = vmatprep.subr.mxu0 0.0
    %362 = vmatpush1.msra.mxu0 0.0
    %363 = vmatprep.subr.mxu0 0.0
    %364 = vmatpush1.msra.mxu0 0.0
    %365 = vmatprep.subr.mxu0 0.0
    %366 = vmatpush1.msra.mxu0 0.0
    %367 = vmatprep.subr.mxu0 0.0
    %368 = vmatpush1.msra.mxu0 0.0
    %369 = vmatprep.subr.mxu0 0.0
    %370 = vmatpush1.msra.mxu0 0.0
    %371 = vmatprep.subr.mxu0 0.0
    %372 = vmatpush1.msra.mxu0 0.0
    %373 = vmatprep.subr.mxu0 0.0
    %374 = vmatpush1.msra.mxu0 0.0
    %375 = vmatprep.subr.mxu0 0.0
    %376 = vmatpush1.msra.mxu0 0.0
    %377 = vmatprep.mubr.f32.mxu0 0.0
    %378 = vmatmul.mubr.f32.gmra.mrb[0].mxu0 %v289
    %v379 = vpop.f32.mrb[0].mxu0
    %v380 = vadd.f32 %v312, %v379
    %v381 = vpop.f32.mrb[0].mxu0
    %382 = vmatprep.mubr.f32.mxu0 0.0
    %383 = vmatmul.mubr.f32.gmra.mrb[0].mxu0 %v290
    %v384 = vpop.f32.mrb[0].mxu0
    %v385 = vadd.f32 %v312, %v384
    %v386 = vpop.f32.mrb[0].mxu0
    %387 = vdwg.mxu0
    %v388 = vtanh.pop %v380
    %v389 = vtanh.pop %v385
    %s390 = scalar_lea.vmem [#allocation2], 384
    %v391 = vld [vmem:[%s390] sm:$0xff]
    %v392 = vld [vmem:[%s390 + $0x8] sm:$0xff]
    %v393 = vld [vmem:[%s390 + $0x10] sm:$0xff]
    %v394 = vld [vmem:[%s390 + $0x18] sm:$0xff]
    %v395 = vld [vmem:[%s390 + $0x20] sm:$0xff]
    %v396 = vld [vmem:[%s390 + $0x28] sm:$0xff]
    %v397 = vld [vmem:[%s390 + $0x30] sm:$0xff]
    %v398 = vld [vmem:[%s390 + $0x38] sm:$0xff]
    %v399 = vld [vmem:[%s390 + $0x40] sm:$0xff]
    %v400 = vld [vmem:[%s390 + $0x48] sm:$0xff]
    %v401 = vld [vmem:[%s390 + $0x50] sm:$0xff]
    %v402 = vld [vmem:[%s390 + $0x58] sm:$0xff]
    %v403 = vld [vmem:[%s390 + $0x60] sm:$0xff]
    %v404 = vld [vmem:[%s390 + $0x68] sm:$0xff]
    %v405 = vld [vmem:[%s390 + $0x70] sm:$0xff]
    %v406 = vld [vmem:[%s390 + $0x78] sm:$0xff]
    %v407 = vld [vmem:[%s3 + $0x4] sm:$0x1]
    %v408 = vlaneseq
    %v409 = vshrl.u32 %v408, 7
    %v410 = vsub.s32 0, %v409
    %v411 = vrot.slane %v407, %v410
    %412 = vmatprep.subr.mxu0 0.0
    %413 = vmatpush1.msra.mxu0 %v391
    %414 = vmatprep.subr.mxu0 0.0
    %415 = vmatpush1.msra.mxu0 %v392
    %416 = vmatprep.subr.mxu0 0.0
    %417 = vmatpush1.msra.mxu0 %v393
    %418 = vmatprep.subr.mxu0 0.0
    %419 = vmatpush1.msra.mxu0 %v394
    %420 = vmatprep.subr.mxu0 0.0
    %421 = vmatpush1.msra.mxu0 %v395
    %422 = vmatprep.subr.mxu0 0.0
    %423 = vmatpush1.msra.mxu0 %v396
    %424 = vmatprep.subr.mxu0 0.0
    %425 = vmatpush1.msra.mxu0 %v397
    %426 = vmatprep.subr.mxu0 0.0
    %427 = vmatpush1.msra.mxu0 %v398
    %428 = vmatprep.subr.mxu0 0.0
    %429 = vmatpush1.msra.mxu0 %v399
    %430 = vmatprep.subr.mxu0 0.0
    %431 = vmatpush1.msra.mxu0 %v400
    %432 = vmatprep.subr.mxu0 0.0
    %433 = vmatpush1.msra.mxu0 %v401
    %434 = vmatprep.subr.mxu0 0.0
    %435 = vmatpush1.msra.mxu0 %v402
    %436 = vmatprep.subr.mxu0 0.0
    %437 = vmatpush1.msra.mxu0 %v403
    %438 = vmatprep.subr.mxu0 0.0
    %439 = vmatpush1.msra.mxu0 %v404
    %440 = vmatprep.subr.mxu0 0.0
    %441 = vmatpush1.msra.mxu0 %v405
    %442 = vmatprep.subr.mxu0 0.0
    %443 = vmatpush1.msra.mxu0 %v406
    %444 = vmatprep.subr.mxu0 0.0
    %445 = vmatpush1.msra.mxu0 0.0
    %446 = vmatprep.subr.mxu0 0.0
    %447 = vmatpush1.msra.mxu0 0.0
    %448 = vmatprep.subr.mxu0 0.0
    %449 = vmatpush1.msra.mxu0 0.0
    %450 = vmatprep.subr.mxu0 0.0
    %451 = vmatpush1.msra.mxu0 0.0
    %452 = vmatprep.subr.mxu0 0.0
    %453 = vmatpush1.msra.mxu0 0.0
    %454 = vmatprep.subr.mxu0 0.0
    %455 = vmatpush1.msra.mxu0 0.0
    %456 = vmatprep.subr.mxu0 0.0
    %457 = vmatpush1.msra.mxu0 0.0
    %458 = vmatprep.subr.mxu0 0.0
    %459 = vmatpush1.msra.mxu0 0.0
    %460 = vmatprep.subr.mxu0 0.0
    %461 = vmatpush1.msra.mxu0 0.0
    %462 = vmatprep.subr.mxu0 0.0
    %463 = vmatpush1.msra.mxu0 0.0
    %464 = vmatprep.subr.mxu0 0.0
    %465 = vmatpush1.msra.mxu0 0.0
    %466 = vmatprep.subr.mxu0 0.0
    %467 = vmatpush1.msra.mxu0 0.0
    %468 = vmatprep.subr.mxu0 0.0
    %469 = vmatpush1.msra.mxu0 0.0
    %470 = vmatprep.subr.mxu0 0.0
    %471 = vmatpush1.msra.mxu0 0.0
    %472 = vmatprep.subr.mxu0 0.0
    %473 = vmatpush1.msra.mxu0 0.0
    %474 = vmatprep.subr.mxu0 0.0
    %475 = vmatpush1.msra.mxu0 0.0
    %476 = vmatprep.mubr.f32.mxu0 0.0
    %477 = vmatmul.mubr.f32.gmra.mrb[0].mxu0 %v388
    %v478 = vpop.f32.mrb[0].mxu0
    %v479 = vadd.f32 %v411, %v478
    %v480 = vpop.f32.mrb[0].mxu0
    %481 = vmatprep.mubr.f32.mxu0 0.0
    %482 = vmatmul.mubr.f32.gmra.mrb[0].mxu0 %v389
    %v483 = vpop.f32.mrb[0].mxu0
    %v484 = vadd.f32 %v411, %v483
    %v485 = vpop.f32.mrb[0].mxu0
    %486 = vdwg.mxu0
    %v487 = vtanh.pop %v479
    %v488 = vtanh.pop %v484
    %s489 = scalar_lea.vmem [#allocation2], 512
    %v490 = vld [vmem:[%s489] sm:$0xff]
    %v491 = vld [vmem:[%s489 + $0x8] sm:$0xff]
    %v492 = vld [vmem:[%s489 + $0x10] sm:$0xff]
    %v493 = vld [vmem:[%s489 + $0x18] sm:$0xff]
    %v494 = vld [vmem:[%s489 + $0x20] sm:$0xff]
    %v495 = vld [vmem:[%s489 + $0x28] sm:$0xff]
    %v496 = vld [vmem:[%s489 + $0x30] sm:$0xff]
    %v497 = vld [vmem:[%s489 + $0x38] sm:$0xff]
    %v498 = vld [vmem:[%s489 + $0x40] sm:$0xff]
    %v499 = vld [vmem:[%s489 + $0x48] sm:$0xff]
    %v500 = vld [vmem:[%s489 + $0x50] sm:$0xff]
    %v501 = vld [vmem:[%s489 + $0x58] sm:$0xff]
    %v502 = vld [vmem:[%s489 + $0x60] sm:$0xff]
    %v503 = vld [vmem:[%s489 + $0x68] sm:$0xff]
    %v504 = vld [vmem:[%s489 + $0x70] sm:$0xff]
    %v505 = vld [vmem:[%s489 + $0x78] sm:$0xff]
    %v506 = vld [vmem:[%s3 + $0x5] sm:$0x1]
    %v507 = vlaneseq
    %v508 = vshrl.u32 %v507, 7
    %v509 = vsub.s32 0, %v508
    %v510 = vrot.slane %v506, %v509
    %511 = vmatprep.subr.mxu0 0.0
    %512 = vmatpush1.msra.mxu0 %v490
    %513 = vmatprep.subr.mxu0 0.0
    %514 = vmatpush1.msra.mxu0 %v491
    %515 = vmatprep.subr.mxu0 0.0
    %516 = vmatpush1.msra.mxu0 %v492
    %517 = vmatprep.subr.mxu0 0.0
    %518 = vmatpush1.msra.mxu0 %v493
    %519 = vmatprep.subr.mxu0 0.0
    %520 = vmatpush1.msra.mxu0 %v494
    %521 = vmatprep.subr.mxu0 0.0
    %522 = vmatpush1.msra.mxu0 %v495
    %523 = vmatprep.subr.mxu0 0.0
    %524 = vmatpush1.msra.mxu0 %v496
    %525 = vmatprep.subr.mxu0 0.0
    %526 = vmatpush1.msra.mxu0 %v497
    %527 = vmatprep.subr.mxu0 0.0
    %528 = vmatpush1.msra.mxu0 %v498
    %529 = vmatprep.subr.mxu0 0.0
    %530 = vmatpush1.msra.mxu0 %v499
    %531 = vmatprep.subr.mxu0 0.0
    %532 = vmatpush1.msra.mxu0 %v500
    %533 = vmatprep.subr.mxu0 0.0
    %534 = vmatpush1.msra.mxu0 %v501
    %535 = vmatprep.subr.mxu0 0.0
    %536 = vmatpush1.msra.mxu0 %v502
    %537 = vmatprep.subr.mxu0 0.0
    %538 = vmatpush1.msra.mxu0 %v503
    %539 = vmatprep.subr.mxu0 0.0
    %540 = vmatpush1.msra.mxu0 %v504
    %541 = vmatprep.subr.mxu0 0.0
    %542 = vmatpush1.msra.mxu0 %v505
    %543 = vmatprep.subr.mxu0 0.0
    %544 = vmatpush1.msra.mxu0 0.0
    %545 = vmatprep.subr.mxu0 0.0
    %546 = vmatpush1.msra.mxu0 0.0
    %547 = vmatprep.subr.mxu0 0.0
    %548 = vmatpush1.msra.mxu0 0.0
    %549 = vmatprep.subr.mxu0 0.0
    %550 = vmatpush1.msra.mxu0 0.0
    %551 = vmatprep.subr.mxu0 0.0
    %552 = vmatpush1.msra.mxu0 0.0
    %553 = vmatprep.subr.mxu0 0.0
    %554 = vmatpush1.msra.mxu0 0.0
    %555 = vmatprep.subr.mxu0 0.0
    %556 = vmatpush1.msra.mxu0 0.0
    %557 = vmatprep.subr.mxu0 0.0
    %558 = vmatpush1.msra.mxu0 0.0
    %559 = vmatprep.subr.mxu0 0.0
    %560 = vmatpush1.msra.mxu0 0.0
    %561 = vmatprep.subr.mxu0 0.0
    %562 = vmatpush1.msra.mxu0 0.0
    %563 = vmatprep.subr.mxu0 0.0
    %564 = vmatpush1.msra.mxu0 0.0
    %565 = vmatprep.subr.mxu0 0.0
    %566 = vmatpush1.msra.mxu0 0.0
    %567 = vmatprep.subr.mxu0 0.0
    %568 = vmatpush1.msra.mxu0 0.0
    %569 = vmatprep.subr.mxu0 0.0
    %570 = vmatpush1.msra.mxu0 0.0
    %571 = vmatprep.subr.mxu0 0.0
    %572 = vmatpush1.msra.mxu0 0.0
    %573 = vmatprep.subr.mxu0 0.0
    %574 = vmatpush1.msra.mxu0 0.0
    %575 = vmatprep.mubr.f32.mxu0 0.0
    %576 = vmatmul.mubr.f32.gmra.mrb[0].mxu0 %v487
    %v577 = vpop.f32.mrb[0].mxu0
    %v578 = vadd.f32 %v510, %v577
    %v579 = vpop.f32.mrb[0].mxu0
    %580 = vmatprep.mubr.f32.mxu0 0.0
    %581 = vmatmul.mubr.f32.gmra.mrb[0].mxu0 %v488
    %v582 = vpop.f32.mrb[0].mxu0
    %v583 = vadd.f32 %v510, %v582
    %v584 = vpop.f32.mrb[0].mxu0
    %585 = vdwg.mxu0
    %v586 = vtanh.pop %v578
    %v587 = vtanh.pop %v583
    %s588 = scalar_lea.vmem [#allocation2], 640
    %v589 = vld [vmem:[%s588] sm:$0xff]
    %v590 = vld [vmem:[%s588 + $0x8] sm:$0xff]
    %v591 = vld [vmem:[%s588 + $0x10] sm:$0xff]
    %v592 = vld [vmem:[%s588 + $0x18] sm:$0xff]
    %v593 = vld [vmem:[%s588 + $0x20] sm:$0xff]
    %v594 = vld [vmem:[%s588 + $0x28] sm:$0xff]
    %v595 = vld [vmem:[%s588 + $0x30] sm:$0xff]
    %v596 = vld [vmem:[%s588 + $0x38] sm:$0xff]
    %v597 = vld [vmem:[%s588 + $0x40] sm:$0xff]
    %v598 = vld [vmem:[%s588 + $0x48] sm:$0xff]
    %v599 = vld [vmem:[%s588 + $0x50] sm:$0xff]
    %v600 = vld [vmem:[%s588 + $0x58] sm:$0xff]
    %v601 = vld [vmem:[%s588 + $0x60] sm:$0xff]
    %v602 = vld [vmem:[%s588 + $0x68] sm:$0xff]
    %v603 = vld [vmem:[%s588 + $0x70] sm:$0xff]
    %v604 = vld [vmem:[%s588 + $0x78] sm:$0xff]
    %v605 = vld [vmem:[%s3 + $0x6] sm:$0x1]
    %v606 = vlaneseq
    %v607 = vshrl.u32 %v606, 7
    %v608 = vsub.s32 0, %v607
    %v609 = vrot.slane %v605, %v608
    %610 = vmatprep.subr.mxu0 0.0
    %611 = vmatpush1.msra.mxu0 %v589
    %612 = vmatprep.subr.mxu0 0.0
    %613 = vmatpush1.msra.mxu0 %v590
    %614 = vmatprep.subr.mxu0 0.0
    %615 = vmatpush1.msra.mxu0 %v591
    %616 = vmatprep.subr.mxu0 0.0
    %617 = vmatpush1.msra.mxu0 %v592
    %618 = vmatprep.subr.mxu0 0.0
    %619 = vmatpush1.msra.mxu0 %v593
    %620 = vmatprep.subr.mxu0 0.0
    %621 = vmatpush1.msra.mxu0 %v594
    %622 = vmatprep.subr.mxu0 0.0
    %623 = vmatpush1.msra.mxu0 %v595
    %624 = vmatprep.subr.mxu0 0.0
    %625 = vmatpush1.msra.mxu0 %v596
    %626 = vmatprep.subr.mxu0 0.0
    %627 = vmatpush1.msra.mxu0 %v597
    %628 = vmatprep.subr.mxu0 0.0
    %629 = vmatpush1.msra.mxu0 %v598
    %630 = vmatprep.subr.mxu0 0.0
    %631 = vmatpush1.msra.mxu0 %v599
    %632 = vmatprep.subr.mxu0 0.0
    %633 = vmatpush1.msra.mxu0 %v600
    %634 = vmatprep.subr.mxu0 0.0
    %635 = vmatpush1.msra.mxu0 %v601
    %636 = vmatprep.subr.mxu0 0.0
    %637 = vmatpush1.msra.mxu0 %v602
    %638 = vmatprep.subr.mxu0 0.0
    %639 = vmatpush1.msra.mxu0 %v603
    %640 = vmatprep.subr.mxu0 0.0
    %641 = vmatpush1.msra.mxu0 %v604
    %642 = vmatprep.subr.mxu0 0.0
    %643 = vmatpush1.msra.mxu0 0.0
    %644 = vmatprep.subr.mxu0 0.0
    %645 = vmatpush1.msra.mxu0 0.0
    %646 = vmatprep.subr.mxu0 0.0
    %647 = vmatpush1.msra.mxu0 0.0
    %648 = vmatprep.subr.mxu0 0.0
    %649 = vmatpush1.msra.mxu0 0.0
    %650 = vmatprep.subr.mxu0 0.0
    %651 = vmatpush1.msra.mxu0 0.0
    %652 = vmatprep.subr.mxu0 0.0
    %653 = vmatpush1.msra.mxu0 0.0
    %654 = vmatprep.subr.mxu0 0.0
    %655 = vmatpush1.msra.mxu0 0.0
    %656 = vmatprep.subr.mxu0 0.0
    %657 = vmatpush1.msra.mxu0 0.0
    %658 = vmatprep.subr.mxu0 0.0
    %659 = vmatpush1.msra.mxu0 0.0
    %660 = vmatprep.subr.mxu0 0.0
    %661 = vmatpush1.msra.mxu0 0.0
    %662 = vmatprep.subr.mxu0 0.0
    %663 = vmatpush1.msra.mxu0 0.0
    %664 = vmatprep.subr.mxu0 0.0
    %665 = vmatpush1.msra.mxu0 0.0
    %666 = vmatprep.subr.mxu0 0.0
    %667 = vmatpush1.msra.mxu0 0.0
    %668 = vmatprep.subr.mxu0 0.0
    %669 = vmatpush1.msra.mxu0 0.0
    %670 = vmatprep.subr.mxu0 0.0
    %671 = vmatpush1.msra.mxu0 0.0
    %672 = vmatprep.subr.mxu0 0.0
    %673 = vmatpush1.msra.mxu0 0.0
    %674 = vmatprep.mubr.f32.mxu0 0.0
    %675 = vmatmul.mubr.f32.gmra.mrb[0].mxu0 %v586
    %v676 = vpop.f32.mrb[0].mxu0
    %v677 = vadd.f32 %v609, %v676
    %v678 = vpop.f32.mrb[0].mxu0
    %679 = vmatprep.mubr.f32.mxu0 0.0
    %680 = vmatmul.mubr.f32.gmra.mrb[0].mxu0 %v587
    %v681 = vpop.f32.mrb[0].mxu0
    %v682 = vadd.f32 %v609, %v681
    %v683 = vpop.f32.mrb[0].mxu0
    %684 = vdwg.mxu0
    %v685 = vtanh.pop %v677
    %v686 = vtanh.pop %v682
    %s687 = scalar_lea.vmem [#allocation2], 768
    %v688 = vld [vmem:[%s687] sm:$0xff]
    %v689 = vld [vmem:[%s687 + $0x8] sm:$0xff]
    %v690 = vld [vmem:[%s687 + $0x10] sm:$0xff]
    %v691 = vld [vmem:[%s687 + $0x18] sm:$0xff]
    %v692 = vld [vmem:[%s687 + $0x20] sm:$0xff]
    %v693 = vld [vmem:[%s687 + $0x28] sm:$0xff]
    %v694 = vld [vmem:[%s687 + $0x30] sm:$0xff]
    %v695 = vld [vmem:[%s687 + $0x38] sm:$0xff]
    %v696 = vld [vmem:[%s687 + $0x40] sm:$0xff]
    %v697 = vld [vmem:[%s687 + $0x48] sm:$0xff]
    %v698 = vld [vmem:[%s687 + $0x50] sm:$0xff]
    %v699 = vld [vmem:[%s687 + $0x58] sm:$0xff]
    %v700 = vld [vmem:[%s687 + $0x60] sm:$0xff]
    %v701 = vld [vmem:[%s687 + $0x68] sm:$0xff]
    %v702 = vld [vmem:[%s687 + $0x70] sm:$0xff]
    %v703 = vld [vmem:[%s687 + $0x78] sm:$0xff]
    %v704 = vld [vmem:[%s3 + $0x7] sm:$0x1]
    %v705 = vlaneseq
    %v706 = vshrl.u32 %v705, 7
    %v707 = vsub.s32 0, %v706
    %v708 = vrot.slane %v704, %v707
    %709 = vmatprep.subr.mxu0 0.0
    %710 = vmatpush1.msra.mxu0 %v688
    %711 = vmatprep.subr.mxu0 0.0
    %712 = vmatpush1.msra.mxu0 %v689
    %713 = vmatprep.subr.mxu0 0.0
    %714 = vmatpush1.msra.mxu0 %v690
    %715 = vmatprep.subr.mxu0 0.0
    %716 = vmatpush1.msra.mxu0 %v691
    %717 = vmatprep.subr.mxu0 0.0
    %718 = vmatpush1.msra.mxu0 %v692
    %719 = vmatprep.subr.mxu0 0.0
    %720 = vmatpush1.msra.mxu0 %v693
    %721 = vmatprep.subr.mxu0 0.0
    %722 = vmatpush1.msra.mxu0 %v694
    %723 = vmatprep.subr.mxu0 0.0
    %724 = vmatpush1.msra.mxu0 %v695
    %725 = vmatprep.subr.mxu0 0.0
    %726 = vmatpush1.msra.mxu0 %v696
    %727 = vmatprep.subr.mxu0 0.0
    %728 = vmatpush1.msra.mxu0 %v697
    %729 = vmatprep.subr.mxu0 0.0
    %730 = vmatpush1.msra.mxu0 %v698
    %731 = vmatprep.subr.mxu0 0.0
    %732 = vmatpush1.msra.mxu0 %v699
    %733 = vmatprep.subr.mxu0 0.0
    %734 = vmatpush1.msra.mxu0 %v700
    %735 = vmatprep.subr.mxu0 0.0
    %736 = vmatpush1.msra.mxu0 %v701
    %737 = vmatprep.subr.mxu0 0.0
    %738 = vmatpush1.msra.mxu0 %v702
    %739 = vmatprep.subr.mxu0 0.0
    %740 = vmatpush1.msra.mxu0 %v703
    %741 = vmatprep.subr.mxu0 0.0
    %742 = vmatpush1.msra.mxu0 0.0
    %743 = vmatprep.subr.mxu0 0.0
    %744 = vmatpush1.msra.mxu0 0.0
    %745 = vmatprep.subr.mxu0 0.0
    %746 = vmatpush1.msra.mxu0 0.0
    %747 = vmatprep.subr.mxu0 0.0
    %748 = vmatpush1.msra.mxu0 0.0
    %749 = vmatprep.subr.mxu0 0.0
    %750 = vmatpush1.msra.mxu0 0.0
    %751 = vmatprep.subr.mxu0 0.0
    %752 = vmatpush1.msra.mxu0 0.0
    %753 = vmatprep.subr.mxu0 0.0
    %754 = vmatpush1.msra.mxu0 0.0
    %755 = vmatprep.subr.mxu0 0.0
    %756 = vmatpush1.msra.mxu0 0.0
    %757 = vmatprep.subr.mxu0 0.0
    %758 = vmatpush1.msra.mxu0 0.0
    %759 = vmatprep.subr.mxu0 0.0
    %760 = vmatpush1.msra.mxu0 0.0
    %761 = vmatprep.subr.mxu0 0.0
    %762 = vmatpush1.msra.mxu0 0.0
    %763 = vmatprep.subr.mxu0 0.0
    %764 = vmatpush1.msra.mxu0 0.0
    %765 = vmatprep.subr.mxu0 0.0
    %766 = vmatpush1.msra.mxu0 0.0
    %767 = vmatprep.subr.mxu0 0.0
    %768 = vmatpush1.msra.mxu0 0.0
    %769 = vmatprep.subr.mxu0 0.0
    %770 = vmatpush1.msra.mxu0 0.0
    %771 = vmatprep.subr.mxu0 0.0
    %772 = vmatpush1.msra.mxu0 0.0
    %773 = vmatprep.mubr.f32.mxu0 0.0
    %774 = vmatmul.mubr.f32.gmra.mrb[0].mxu0 %v685
    %v775 = vpop.f32.mrb[0].mxu0
    %v776 = vadd.f32 %v708, %v775
    %v777 = vpop.f32.mrb[0].mxu0
    %778 = vmatprep.mubr.f32.mxu0 0.0
    %779 = vmatmul.mubr.f32.gmra.mrb[0].mxu0 %v686
    %v780 = vpop.f32.mrb[0].mxu0
    %v781 = vadd.f32 %v708, %v780
    %v782 = vpop.f32.mrb[0].mxu0
    %783 = vdwg.mxu0
    %vm784 = vcmask 982016
    %785 = vst.msk [vmem:[#allocation5] sm:$0xff] %vm784, %v776
    %786 = vst.msk [vmem:[#allocation5 + $0x8] sm:$0xff] %vm784, %v781
    // Predicated region
    $region22: #{_net_trunk_call.1} parent=1 // pred_check
      _
    $region23: #{_net_trunk_call.1} parent=1 // pred_check_branch
      %788 = sbr.rel (0) target = $region25
    $region24: #{_net_trunk_call.1} parent=1 // pred_region
      %s790 = ssub.s32 256, 256
      %791 = vsyncadd [#allocation4], %s790
      %s792 = sshll.u32 [#allocation5], 4
      %s793 = int_to_ptr.vmem [resolvable:$true] %s792
      %798 = dma.vmem_to_hbm [thread:$0]  %s793, 256, %s4, [#allocation4], 128, 128, 8
    $region25: #{_net_trunk_call.1} parent=1 // pred_fallthru
      _
    // Predicated region
    $region26: #{_net_trunk_call.1} parent=1 // pred_check
      _
    $region27: #{_net_trunk_call.1} parent=1 // pred_check_branch
      %800 = sbr.rel (0) target = $region29
    $region28: #{_net_trunk_call.1} parent=1 // pred_region
      %801 = dma.done [#allocation4], 256
    $region29: #{_net_trunk_call.1} parent=1 // pred_fallthru
      _
    %802 = vsyncpa [#allocation3], 1
    %803 = vsyncpa [#allocation4], 1

</llo_original>
